<compile_context>
chip_gen: v5e
topology: v5e:2x2
jax: 0.10.0
libtpu: 0.0.40
codegen_flags: <defaults>
</compile_context>

<pallas_src>
import functools

import jax
import jax.numpy as jnp
from jax.experimental import pallas as pl
from jax.experimental.pallas import tpu as pltpu


def _padded_vmem_bytes(shape, dtype):
    """Rough VMEM footprint of one buffer after (sublane, lane) tile padding."""
    itemsize = jnp.dtype(dtype).itemsize
    sub = 8 * max(1, 4 // itemsize)          # 8 rows for f32, 16 for bf16
    dims = list(shape)
    if len(dims) >= 1:
        dims[-1] = -(-dims[-1] // 128) * 128
    if len(dims) >= 2:
        dims[-2] = -(-dims[-2] // sub) * sub
    n = 1
    for d in dims:
        n *= int(d)
    return n * itemsize


def _make_voice_conv_kernel(*, C, OC, KH, KW, H, W, padding, dilation,
                            WP, OH, OW, TM, tail, compute_dtype):
    """Builds the per-sample kernel.

    Refs (grid step n = sample index):
      x_ref   : (1, C, H*W)     f32  raw (unpadded) input, flattened spatial
      w_ref   : (OC, K*C)       compute_dtype  weights, reduce dim ordered (kh, kw, c)
      g_ref   : (OC, OW)        f32  gamma row map
      b_ref   : (OC, OW)        f32  beta_eff row map (= bias*gamma + beta)
      o_ref   : (1, OC, OH*OW)  flat NCHW output (lane-dense)
      pad_ref : (C, L)          f32  scratch: zero-padded flat input, L = HP*WP + tail
      slab_ref: (K*C, TM)       f32  scratch: shifted-tap slab, TM = OH*WP
    """

    def kernel(x_ref, w_ref, g_ref, b_ref, o_ref, pad_ref, slab_ref):
        # --- 1) zero-pad the input into the flat per-sample buffer ------------
        # Re-zero every step: scratch persists across grid steps and the grid is
        # "parallel", so a one-time init at program_id==0 would be wrong on
        # multi-TensorCore chips.  The memset is a tiny VMEM-only cost.
        if padding > 0 or tail > 0:
            pad_ref[...] = jnp.zeros_like(pad_ref)
        for h in range(H):
            dst = (h + padding) * WP + padding
            pad_ref[:, dst:dst + W] = x_ref[0, :, h * W:(h + 1) * W]

        # --- 2) assemble the (K*C, TM) shifted-tap slab ------------------------
        # stride=1: every kernel tap (i, j) is one contiguous lane-offset slice
        # of the flat padded input; slab rows t*C:(t+1)*C match the (kh, kw, c)
        # ordering of the reshaped weights.
        for i in range(KH):
            for j in range(KW):
                t = i * KW + j
                off = (i * WP + j) * dilation
                slab_ref[t * C:(t + 1) * C, :] = pad_ref[:, off:off + TM]

        # --- 3) single MXU contraction over K*C (f32 accumulation) -------------
        acc = jnp.dot(w_ref[...],
                      slab_ref[...].astype(compute_dtype),
                      preferred_element_type=jnp.float32)        # (OC, TM) f32

        # --- 4) affine epilogue + width un-pad, straight into flat NCHW --------
        g = g_ref[...]
        b = b_ref[...]
        for r in range(OH):
            row = acc[:, r * WP:r * WP + OW]                      # (OC, OW) f32
            o_ref[0, :, r * OW:(r + 1) * OW] = (row * g + b).astype(o_ref.dtype)

    return kernel


@functools.partial(jax.jit,
                   static_argnames=("stride", "padding", "dilation", "groups",
                                    "compute_dtype", "out_dtype"))
def voice_conv2d(x, weight, bias, gamma, beta, *,
                 stride=1, padding=0, dilation=1, groups=1,
                 compute_dtype=jnp.bfloat16, out_dtype=None):
    """VoiceConv2d forward: Conv2d(x) * gamma + beta.

    x: (N, C, H, W) f32; weight: (OC, C, KH, KW); bias: (OC,) or None;
    gamma/beta: (1, OC, 1, OW) where OW is the conv output width.
    """
    N, C, H, W = x.shape
    OC, Cw, KH, KW = weight.shape
    if groups != 1 or Cw != C:
        raise NotImplementedError("groups != 1 not supported by the fused kernel")
    if stride != 1:
        raise NotImplementedError("stride != 1 not supported by the fused kernel")

    HP, WP = H + 2 * padding, W + 2 * padding
    OH = HP - dilation * (KH - 1)
    OW = WP - dilation * (KW - 1)
    if OH <= 0 or OW <= 0:
        raise ValueError("non-positive conv output size")
    if gamma.shape != (1, OC, 1, OW) or beta.shape != (1, OC, 1, OW):
        raise ValueError("gamma/beta must have shape (1, OC, 1, out_width=OW)")

    K = KH * KW
    TM = OH * WP                       # flat spatial with padded-width row stride
    tail = (KW - 1) * dilation         # bottom-right taps read slightly past HP*WP
    L = HP * WP + tail
    out_dtype = x.dtype if out_dtype is None else out_dtype

    # Raw input, flattened spatial (free reshape under jit; padding is in-kernel).
    xflat = x.reshape(N, C, H * W)

    # Weights with the reduce dim ordered (kh, kw, c) to match the slab rows.
    w2 = weight.transpose(0, 2, 3, 1).reshape(OC, K * C).astype(compute_dtype)

    # gamma / beta_eff row maps; conv bias folded into beta_eff.
    g2 = gamma.reshape(OC, OW).astype(jnp.float32)
    b2 = beta.reshape(OC, OW).astype(jnp.float32)
    if bias is not None:
        b2 = bias.reshape(OC, 1).astype(jnp.float32) * g2 + b2

    kernel = _make_voice_conv_kernel(
        C=C, OC=OC, KH=KH, KW=KW, H=H, W=W, padding=padding, dilation=dilation,
        WP=WP, OH=OH, OW=OW, TM=TM, tail=tail, compute_dtype=compute_dtype)

    # Explicit VMEM budget: double-buffered blocks + scratch, with headroom,
    # clamped to stay within every generation's physical VMEM.
    est = (2 * _padded_vmem_bytes((1, C, H * W), x.dtype)
           + 2 * _padded_vmem_bytes((OC, K * C), compute_dtype)
           + 4 * _padded_vmem_bytes((OC, OW), jnp.float32)
           + 2 * _padded_vmem_bytes((1, OC, OH * OW), out_dtype)
           + _padded_vmem_bytes((C, L), jnp.float32)
           + _padded_vmem_bytes((K * C, TM), jnp.float32))
    vmem_limit = int(min(64 * 1024 * 1024, max(32 * 1024 * 1024, 2 * est)))

    out_flat = pl.pallas_call(
        kernel,
        out_shape=jax.ShapeDtypeStruct((N, OC, OH * OW), out_dtype),
        grid_spec=pltpu.PrefetchScalarGridSpec(
            num_scalar_prefetch=0,
            grid=(N,),
            in_specs=[
                pl.BlockSpec((1, C, H * W), lambda n: (n, 0, 0)),   # streamed input
                pl.BlockSpec((OC, K * C), lambda n: (0, 0)),        # resident weights
                pl.BlockSpec((OC, OW), lambda n: (0, 0)),           # resident gamma
                pl.BlockSpec((OC, OW), lambda n: (0, 0)),           # resident beta_eff
            ],
            out_specs=pl.BlockSpec((1, OC, OH * OW), lambda n: (n, 0, 0)),
            scratch_shapes=[
                pltpu.VMEM((C, L), jnp.float32),        # padded flat input
                pltpu.VMEM((K * C, TM), jnp.float32),   # shifted-tap slab
            ],
        ),
        compiler_params=pltpu.CompilerParams(
            dimension_semantics=("parallel",),
            vmem_limit_bytes=vmem_limit),
    )(xflat, w2, g2, b2)

    # Contiguous (free) reshape to NCHW — no un-pad copy, no extra HBM pass.
    return out_flat.reshape(N, OC, OH, OW)


if __name__ == "__main__":
    # Module config: in_channels=4, out_channels=8, kernel_size=3, stride=1,
    # padding=1, dilation=1, groups=1, bias=True, out_width=16.
    N, C, H, W = 2, 4, 16, 16
    OC, KH, KW = 8, 3, 3
    stride, padding, dilation = 1, 1, 1
    OH = (H + 2 * padding - dilation * (KH - 1) - 1) // stride + 1   # 16
    OW = (W + 2 * padding - dilation * (KW - 1) - 1) // stride + 1   # 16 = out_width

    key = jax.random.PRNGKey(0)
    kx, kw, kb, kg, kbt = jax.random.split(key, 5)
    x = jax.random.normal(kx, (N, C, H, W), dtype=jnp.float32)
    fan_in = C * KH * KW
    bound = 1.0 / (fan_in ** 0.5)
    weight = jax.random.uniform(kw, (OC, C, KH, KW), jnp.float32, -bound, bound)
    bias = jax.random.uniform(kb, (OC,), jnp.float32, -bound, bound)
    # Module init is gamma=1, beta=0; use non-trivial values to exercise the
    # fused affine epilogue (they are learnable parameters).
    gamma = 1.0 + 0.1 * jax.random.normal(kg, (1, OC, 1, OW), dtype=jnp.float32)
    beta = 0.1 * jax.random.normal(kbt, (1, OC, 1, OW), dtype=jnp.float32)

    out = voice_conv2d(x, weight, bias, gamma, beta,
                       stride=stride, padding=padding, dilation=dilation)
    out = jax.block_until_ready(out)

    # Reference 1 (tight): same bf16-rounded MXU inputs, exact products, f32 accum.
    xb = x.astype(jnp.bfloat16).astype(jnp.float32)
    wb = weight.astype(jnp.bfloat16).astype(jnp.float32)
    ref = jax.lax.conv_general_dilated(
        xb, wb, (stride, stride), [(padding, padding), (padding, padding)],
        rhs_dilation=(dilation, dilation),
        dimension_numbers=("NCHW", "OIHW", "NCHW"),
        precision=jax.lax.Precision.HIGHEST,
        preferred_element_type=jnp.float32)
    ref = (ref + bias.reshape(1, OC, 1, 1)) * gamma + beta

    # Reference 2 (loose): full f32 inputs, bounds the bf16 MXU-input error.
    ref32 = jax.lax.conv_general_dilated(
        x, weight, (stride, stride), [(padding, padding), (padding, padding)],
        rhs_dilation=(dilation, dilation),
        dimension_numbers=("NCHW", "OIHW", "NCHW"),
        precision=jax.lax.Precision.HIGHEST,
        preferred_element_type=jnp.float32)
    ref32 = (ref32 + bias.reshape(1, OC, 1, 1)) * gamma + beta

    assert out.shape == (N, OC, OH, OW)
    assert jnp.allclose(out, ref, atol=1e-4, rtol=1e-4), "mismatch vs bf16-input reference"
    assert jnp.allclose(out, ref32, atol=1e-1, rtol=1e-1), "mismatch vs f32 reference"

    # bf16-output path (review: emit the consumer's dtype to halve store traffic).
    out_bf16 = voice_conv2d(x, weight, bias, gamma, beta,
                            stride=stride, padding=padding, dilation=dilation,
                            out_dtype=jnp.bfloat16)
    out_bf16 = jax.block_until_ready(out_bf16)
    assert out_bf16.dtype == jnp.bfloat16
    assert jnp.allclose(out_bf16.astype(jnp.float32), ref, atol=5e-2, rtol=5e-2), \
        "mismatch vs bf16-input reference (bf16 output)"

    print("KERNEL_OK")
</pallas_src>

<mosaic_0001>
module attributes {stable_mosaic.version = 11 : i64} {
  func.func @kernel(%arg0: i32, %arg1: memref<1x4x256xf32, #tpu.memory_space<vmem>>, %arg2: memref<8x36xbf16, #tpu.memory_space<vmem>>, %arg3: memref<8x16xf32, #tpu.memory_space<vmem>>, %arg4: memref<8x16xf32, #tpu.memory_space<vmem>>, %arg5: memref<1x8x256xf32, #tpu.memory_space<vmem>>, %arg6: memref<4x326xf32, #tpu.memory_space<vmem>>, %arg7: memref<36x288xf32, #tpu.memory_space<vmem>>) attributes {dimension_semantics = [#tpu.dimension_semantics<parallel>], iteration_bounds = array<i64: 2>, scalar_prefetch = 0 : i64, scratch_operands = 2 : i64, tpu.core_type = #tpu.core_type<tc>, window_params = [{transform_indices = @transform_0, window_bounds = array<i64: 1, 4, 256>}, {pipeline_mode = #tpu.pipeline_mode<synchronous>, transform_indices = @transform_1, window_bounds = array<i64: 8, 36>}, {pipeline_mode = #tpu.pipeline_mode<synchronous>, transform_indices = @transform_2, window_bounds = array<i64: 8, 16>}, {pipeline_mode = #tpu.pipeline_mode<synchronous>, transform_indices = @transform_3, window_bounds = array<i64: 8, 16>}, {transform_indices = @transform_4, window_bounds = array<i64: 1, 8, 256>}]} {
    %cst = arith.constant 0.000000e+00 : f32
    %0 = vector.broadcast %cst : f32 to vector<4x326xf32>
    %c0 = arith.constant 0 : index
    %c0_0 = arith.constant 0 : index
    %1 = vector.load %arg6[%c0, %c0_0] : memref<4x326xf32, #tpu.memory_space<vmem>>, vector<4x326xf32>
    tpu.vector_store %arg6[%c0, %c0_0], %0 {strides = array<i32>} : memref<4x326xf32, #tpu.memory_space<vmem>>, vector<4x326xf32>,
    %c0_1 = arith.constant 0 : index
    %c0_2 = arith.constant 0 : index
    %c0_3 = arith.constant 0 : index
    %2 = vector.load %arg1[%c0_1, %c0_2, %c0_3] : memref<1x4x256xf32, #tpu.memory_space<vmem>>, vector<1x4x16xf32>
    %3 = vector.shape_cast %2 : vector<1x4x16xf32> to vector<4x16xf32>
    %c0_4 = arith.constant 0 : index
    %c19 = arith.constant 19 : index
    %4 = vector.load %arg6[%c0_4, %c19] : memref<4x326xf32, #tpu.memory_space<vmem>>, vector<4x16xf32>
    tpu.vector_store %arg6[%c0_4, %c19], %3 {strides = array<i32>} : memref<4x326xf32, #tpu.memory_space<vmem>>, vector<4x16xf32>,
    %c0_5 = arith.constant 0 : index
    %c0_6 = arith.constant 0 : index
    %c16 = arith.constant 16 : index
    %5 = vector.load %arg1[%c0_5, %c0_6, %c16] : memref<1x4x256xf32, #tpu.memory_space<vmem>>, vector<1x4x16xf32>
    %6 = vector.shape_cast %5 : vector<1x4x16xf32> to vector<4x16xf32>
    %c0_7 = arith.constant 0 : index
    %c37 = arith.constant 37 : index
    %7 = vector.load %arg6[%c0_7, %c37] : memref<4x326xf32, #tpu.memory_space<vmem>>, vector<4x16xf32>
    tpu.vector_store %arg6[%c0_7, %c37], %6 {strides = array<i32>} : memref<4x326xf32, #tpu.memory_space<vmem>>, vector<4x16xf32>,
    %c0_8 = arith.constant 0 : index
    %c0_9 = arith.constant 0 : index
    %c32 = arith.constant 32 : index
    %8 = vector.load %arg1[%c0_8, %c0_9, %c32] : memref<1x4x256xf32, #tpu.memory_space<vmem>>, vector<1x4x16xf32>
    %9 = vector.shape_cast %8 : vector<1x4x16xf32> to vector<4x16xf32>
    %c0_10 = arith.constant 0 : index
    %c55 = arith.constant 55 : index
    %10 = vector.load %arg6[%c0_10, %c55] : memref<4x326xf32, #tpu.memory_space<vmem>>, vector<4x16xf32>
    tpu.vector_store %arg6[%c0_10, %c55], %9 {strides = array<i32>} : memref<4x326xf32, #tpu.memory_space<vmem>>, vector<4x16xf32>,
    %c0_11 = arith.constant 0 : index
    %c0_12 = arith.constant 0 : index
    %c48 = arith.constant 48 : index
    %11 = vector.load %arg1[%c0_11, %c0_12, %c48] : memref<1x4x256xf32, #tpu.memory_space<vmem>>, vector<1x4x16xf32>
    %12 = vector.shape_cast %11 : vector<1x4x16xf32> to vector<4x16xf32>
    %c0_13 = arith.constant 0 : index
    %c73 = arith.constant 73 : index
    %13 = vector.load %arg6[%c0_13, %c73] : memref<4x326xf32, #tpu.memory_space<vmem>>, vector<4x16xf32>
    tpu.vector_store %arg6[%c0_13, %c73], %12 {strides = array<i32>} : memref<4x326xf32, #tpu.memory_space<vmem>>, vector<4x16xf32>,
    %c0_14 = arith.constant 0 : index
    %c0_15 = arith.constant 0 : index
    %c64 = arith.constant 64 : index
    %14 = vector.load %arg1[%c0_14, %c0_15, %c64] : memref<1x4x256xf32, #tpu.memory_space<vmem>>, vector<1x4x16xf32>
    %15 = vector.shape_cast %14 : vector<1x4x16xf32> to vector<4x16xf32>
    %c0_16 = arith.constant 0 : index
    %c91 = arith.constant 91 : index
    %16 = vector.load %arg6[%c0_16, %c91] : memref<4x326xf32, #tpu.memory_space<vmem>>, vector<4x16xf32>
    tpu.vector_store %arg6[%c0_16, %c91], %15 {strides = array<i32>} : memref<4x326xf32, #tpu.memory_space<vmem>>, vector<4x16xf32>,
    %c0_17 = arith.constant 0 : index
    %c0_18 = arith.constant 0 : index
    %c80 = arith.constant 80 : index
    %17 = vector.load %arg1[%c0_17, %c0_18, %c80] : memref<1x4x256xf32, #tpu.memory_space<vmem>>, vector<1x4x16xf32>
    %18 = vector.shape_cast %17 : vector<1x4x16xf32> to vector<4x16xf32>
    %c0_19 = arith.constant 0 : index
    %c109 = arith.constant 109 : index
    %19 = vector.load %arg6[%c0_19, %c109] : memref<4x326xf32, #tpu.memory_space<vmem>>, vector<4x16xf32>
    tpu.vector_store %arg6[%c0_19, %c109], %18 {strides = array<i32>} : memref<4x326xf32, #tpu.memory_space<vmem>>, vector<4x16xf32>,
    %c0_20 = arith.constant 0 : index
    %c0_21 = arith.constant 0 : index
    %c96 = arith.constant 96 : index
    %20 = vector.load %arg1[%c0_20, %c0_21, %c96] : memref<1x4x256xf32, #tpu.memory_space<vmem>>, vector<1x4x16xf32>
    %21 = vector.shape_cast %20 : vector<1x4x16xf32> to vector<4x16xf32>
    %c0_22 = arith.constant 0 : index
    %c127 = arith.constant 127 : index
    %22 = vector.load %arg6[%c0_22, %c127] : memref<4x326xf32, #tpu.memory_space<vmem>>, vector<4x16xf32>
    tpu.vector_store %arg6[%c0_22, %c127], %21 {strides = array<i32>} : memref<4x326xf32, #tpu.memory_space<vmem>>, vector<4x16xf32>,
    %c0_23 = arith.constant 0 : index
    %c0_24 = arith.constant 0 : index
    %c112 = arith.constant 112 : index
    %23 = vector.load %arg1[%c0_23, %c0_24, %c112] : memref<1x4x256xf32, #tpu.memory_space<vmem>>, vector<1x4x16xf32>
    %24 = vector.shape_cast %23 : vector<1x4x16xf32> to vector<4x16xf32>
    %c0_25 = arith.constant 0 : index
    %c145 = arith.constant 145 : index
    %25 = vector.load %arg6[%c0_25, %c145] : memref<4x326xf32, #tpu.memory_space<vmem>>, vector<4x16xf32>
    tpu.vector_store %arg6[%c0_25, %c145], %24 {strides = array<i32>} : memref<4x326xf32, #tpu.memory_space<vmem>>, vector<4x16xf32>,
    %c0_26 = arith.constant 0 : index
    %c0_27 = arith.constant 0 : index
    %c128 = arith.constant 128 : index
    %26 = vector.load %arg1[%c0_26, %c0_27, %c128] : memref<1x4x256xf32, #tpu.memory_space<vmem>>, vector<1x4x16xf32>
    %27 = vector.shape_cast %26 : vector<1x4x16xf32> to vector<4x16xf32>
    %c0_28 = arith.constant 0 : index
    %c163 = arith.constant 163 : index
    %28 = vector.load %arg6[%c0_28, %c163] : memref<4x326xf32, #tpu.memory_space<vmem>>, vector<4x16xf32>
    tpu.vector_store %arg6[%c0_28, %c163], %27 {strides = array<i32>} : memref<4x326xf32, #tpu.memory_space<vmem>>, vector<4x16xf32>,
    %c0_29 = arith.constant 0 : index
    %c0_30 = arith.constant 0 : index
    %c144 = arith.constant 144 : index
    %29 = vector.load %arg1[%c0_29, %c0_30, %c144] : memref<1x4x256xf32, #tpu.memory_space<vmem>>, vector<1x4x16xf32>
    %30 = vector.shape_cast %29 : vector<1x4x16xf32> to vector<4x16xf32>
    %c0_31 = arith.constant 0 : index
    %c181 = arith.constant 181 : index
    %31 = vector.load %arg6[%c0_31, %c181] : memref<4x326xf32, #tpu.memory_space<vmem>>, vector<4x16xf32>
    tpu.vector_store %arg6[%c0_31, %c181], %30 {strides = array<i32>} : memref<4x326xf32, #tpu.memory_space<vmem>>, vector<4x16xf32>,
    %c0_32 = arith.constant 0 : index
    %c0_33 = arith.constant 0 : index
    %c160 = arith.constant 160 : index
    %32 = vector.load %arg1[%c0_32, %c0_33, %c160] : memref<1x4x256xf32, #tpu.memory_space<vmem>>, vector<1x4x16xf32>
    %33 = vector.shape_cast %32 : vector<1x4x16xf32> to vector<4x16xf32>
    %c0_34 = arith.constant 0 : index
    %c199 = arith.constant 199 : index
    %34 = vector.load %arg6[%c0_34, %c199] : memref<4x326xf32, #tpu.memory_space<vmem>>, vector<4x16xf32>
    tpu.vector_store %arg6[%c0_34, %c199], %33 {strides = array<i32>} : memref<4x326xf32, #tpu.memory_space<vmem>>, vector<4x16xf32>,
    %c0_35 = arith.constant 0 : index
    %c0_36 = arith.constant 0 : index
    %c176 = arith.constant 176 : index
    %35 = vector.load %arg1[%c0_35, %c0_36, %c176] : memref<1x4x256xf32, #tpu.memory_space<vmem>>, vector<1x4x16xf32>
    %36 = vector.shape_cast %35 : vector<1x4x16xf32> to vector<4x16xf32>
    %c0_37 = arith.constant 0 : index
    %c217 = arith.constant 217 : index
    %37 = vector.load %arg6[%c0_37, %c217] : memref<4x326xf32, #tpu.memory_space<vmem>>, vector<4x16xf32>
    tpu.vector_store %arg6[%c0_37, %c217], %36 {strides = array<i32>} : memref<4x326xf32, #tpu.memory_space<vmem>>, vector<4x16xf32>,
    %c0_38 = arith.constant 0 : index
    %c0_39 = arith.constant 0 : index
    %c192 = arith.constant 192 : index
    %38 = vector.load %arg1[%c0_38, %c0_39, %c192] : memref<1x4x256xf32, #tpu.memory_space<vmem>>, vector<1x4x16xf32>
    %39 = vector.shape_cast %38 : vector<1x4x16xf32> to vector<4x16xf32>
    %c0_40 = arith.constant 0 : index
    %c235 = arith.constant 235 : index
    %40 = vector.load %arg6[%c0_40, %c235] : memref<4x326xf32, #tpu.memory_space<vmem>>, vector<4x16xf32>
    tpu.vector_store %arg6[%c0_40, %c235], %39 {strides = array<i32>} : memref<4x326xf32, #tpu.memory_space<vmem>>, vector<4x16xf32>,
    %c0_41 = arith.constant 0 : index
    %c0_42 = arith.constant 0 : index
    %c208 = arith.constant 208 : index
    %41 = vector.load %arg1[%c0_41, %c0_42, %c208] : memref<1x4x256xf32, #tpu.memory_space<vmem>>, vector<1x4x16xf32>
    %42 = vector.shape_cast %41 : vector<1x4x16xf32> to vector<4x16xf32>
    %c0_43 = arith.constant 0 : index
    %c253 = arith.constant 253 : index
    %43 = vector.load %arg6[%c0_43, %c253] : memref<4x326xf32, #tpu.memory_space<vmem>>, vector<4x16xf32>
    tpu.vector_store %arg6[%c0_43, %c253], %42 {strides = array<i32>} : memref<4x326xf32, #tpu.memory_space<vmem>>, vector<4x16xf32>,
    %c0_44 = arith.constant 0 : index
    %c0_45 = arith.constant 0 : index
    %c224 = arith.constant 224 : index
    %44 = vector.load %arg1[%c0_44, %c0_45, %c224] : memref<1x4x256xf32, #tpu.memory_space<vmem>>, vector<1x4x16xf32>
    %45 = vector.shape_cast %44 : vector<1x4x16xf32> to vector<4x16xf32>
    %c0_46 = arith.constant 0 : index
    %c271 = arith.constant 271 : index
    %46 = vector.load %arg6[%c0_46, %c271] : memref<4x326xf32, #tpu.memory_space<vmem>>, vector<4x16xf32>
    tpu.vector_store %arg6[%c0_46, %c271], %45 {strides = array<i32>} : memref<4x326xf32, #tpu.memory_space<vmem>>, vector<4x16xf32>,
    %c0_47 = arith.constant 0 : index
    %c0_48 = arith.constant 0 : index
    %c240 = arith.constant 240 : index
    %47 = vector.load %arg1[%c0_47, %c0_48, %c240] : memref<1x4x256xf32, #tpu.memory_space<vmem>>, vector<1x4x16xf32>
    %48 = vector.shape_cast %47 : vector<1x4x16xf32> to vector<4x16xf32>
    %c0_49 = arith.constant 0 : index
    %c289 = arith.constant 289 : index
    %49 = vector.load %arg6[%c0_49, %c289] : memref<4x326xf32, #tpu.memory_space<vmem>>, vector<4x16xf32>
    tpu.vector_store %arg6[%c0_49, %c289], %48 {strides = array<i32>} : memref<4x326xf32, #tpu.memory_space<vmem>>, vector<4x16xf32>,
    %c0_50 = arith.constant 0 : index
    %c0_51 = arith.constant 0 : index
    %50 = vector.load %arg6[%c0_50, %c0_51] : memref<4x326xf32, #tpu.memory_space<vmem>>, vector<4x288xf32>
    %c0_52 = arith.constant 0 : index
    %c0_53 = arith.constant 0 : index
    %51 = vector.load %arg7[%c0_52, %c0_53] : memref<36x288xf32, #tpu.memory_space<vmem>>, vector<4x288xf32>
    tpu.vector_store %arg7[%c0_52, %c0_53], %50 {strides = array<i32>} : memref<36x288xf32, #tpu.memory_space<vmem>>, vector<4x288xf32>,
    %c0_54 = arith.constant 0 : index
    %c1 = arith.constant 1 : index
    %52 = vector.load %arg6[%c0_54, %c1] : memref<4x326xf32, #tpu.memory_space<vmem>>, vector<4x288xf32>
    %c4 = arith.constant 4 : index
    %c0_55 = arith.constant 0 : index
    %53 = vector.load %arg7[%c4, %c0_55] : memref<36x288xf32, #tpu.memory_space<vmem>>, vector<4x288xf32>
    tpu.vector_store %arg7[%c4, %c0_55], %52 {strides = array<i32>} : memref<36x288xf32, #tpu.memory_space<vmem>>, vector<4x288xf32>,
    %c0_56 = arith.constant 0 : index
    %c2 = arith.constant 2 : index
    %54 = vector.load %arg6[%c0_56, %c2] : memref<4x326xf32, #tpu.memory_space<vmem>>, vector<4x288xf32>
    %c8 = arith.constant 8 : index
    %c0_57 = arith.constant 0 : index
    %55 = vector.load %arg7[%c8, %c0_57] : memref<36x288xf32, #tpu.memory_space<vmem>>, vector<4x288xf32>
    tpu.vector_store %arg7[%c8, %c0_57], %54 {strides = array<i32>} : memref<36x288xf32, #tpu.memory_space<vmem>>, vector<4x288xf32>,
    %c0_58 = arith.constant 0 : index
    %c18 = arith.constant 18 : index
    %56 = vector.load %arg6[%c0_58, %c18] : memref<4x326xf32, #tpu.memory_space<vmem>>, vector<4x288xf32>
    %c12 = arith.constant 12 : index
    %c0_59 = arith.constant 0 : index
    %57 = vector.load %arg7[%c12, %c0_59] : memref<36x288xf32, #tpu.memory_space<vmem>>, vector<4x288xf32>
    tpu.vector_store %arg7[%c12, %c0_59], %56 {strides = array<i32>} : memref<36x288xf32, #tpu.memory_space<vmem>>, vector<4x288xf32>,
    %c0_60 = arith.constant 0 : index
    %c19_61 = arith.constant 19 : index
    %58 = vector.load %arg6[%c0_60, %c19_61] : memref<4x326xf32, #tpu.memory_space<vmem>>, vector<4x288xf32>
    %c16_62 = arith.constant 16 : index
    %c0_63 = arith.constant 0 : index
    %59 = vector.load %arg7[%c16_62, %c0_63] : memref<36x288xf32, #tpu.memory_space<vmem>>, vector<4x288xf32>
    tpu.vector_store %arg7[%c16_62, %c0_63], %58 {strides = array<i32>} : memref<36x288xf32, #tpu.memory_space<vmem>>, vector<4x288xf32>,
    %c0_64 = arith.constant 0 : index
    %c20 = arith.constant 20 : index
    %60 = vector.load %arg6[%c0_64, %c20] : memref<4x326xf32, #tpu.memory_space<vmem>>, vector<4x288xf32>
    %c20_65 = arith.constant 20 : index
    %c0_66 = arith.constant 0 : index
    %61 = vector.load %arg7[%c20_65, %c0_66] : memref<36x288xf32, #tpu.memory_space<vmem>>, vector<4x288xf32>
    tpu.vector_store %arg7[%c20_65, %c0_66], %60 {strides = array<i32>} : memref<36x288xf32, #tpu.memory_space<vmem>>, vector<4x288xf32>,
    %c0_67 = arith.constant 0 : index
    %c36 = arith.constant 36 : index
    %62 = vector.load %arg6[%c0_67, %c36] : memref<4x326xf32, #tpu.memory_space<vmem>>, vector<4x288xf32>
    %c24 = arith.constant 24 : index
    %c0_68 = arith.constant 0 : index
    %63 = vector.load %arg7[%c24, %c0_68] : memref<36x288xf32, #tpu.memory_space<vmem>>, vector<4x288xf32>
    tpu.vector_store %arg7[%c24, %c0_68], %62 {strides = array<i32>} : memref<36x288xf32, #tpu.memory_space<vmem>>, vector<4x288xf32>,
    %c0_69 = arith.constant 0 : index
    %c37_70 = arith.constant 37 : index
    %64 = vector.load %arg6[%c0_69, %c37_70] : memref<4x326xf32, #tpu.memory_space<vmem>>, vector<4x288xf32>
    %c28 = arith.constant 28 : index
    %c0_71 = arith.constant 0 : index
    %65 = vector.load %arg7[%c28, %c0_71] : memref<36x288xf32, #tpu.memory_space<vmem>>, vector<4x288xf32>
    tpu.vector_store %arg7[%c28, %c0_71], %64 {strides = array<i32>} : memref<36x288xf32, #tpu.memory_space<vmem>>, vector<4x288xf32>,
    %c0_72 = arith.constant 0 : index
    %c38 = arith.constant 38 : index
    %66 = vector.load %arg6[%c0_72, %c38] : memref<4x326xf32, #tpu.memory_space<vmem>>, vector<4x288xf32>
    %c32_73 = arith.constant 32 : index
    %c0_74 = arith.constant 0 : index
    %67 = vector.load %arg7[%c32_73, %c0_74] : memref<36x288xf32, #tpu.memory_space<vmem>>, vector<4x288xf32>
    tpu.vector_store %arg7[%c32_73, %c0_74], %66 {strides = array<i32>} : memref<36x288xf32, #tpu.memory_space<vmem>>, vector<4x288xf32>,
    %c0_75 = arith.constant 0 : index
    %c0_76 = arith.constant 0 : index
    %68 = vector.load %arg2[%c0_75, %c0_76] : memref<8x36xbf16, #tpu.memory_space<vmem>>, vector<8x36xbf16>
    %c0_77 = arith.constant 0 : index
    %c0_78 = arith.constant 0 : index
    %69 = vector.load %arg7[%c0_77, %c0_78] : memref<36x288xf32, #tpu.memory_space<vmem>>, vector<36x288xf32>
    %70 = arith.truncf %69 : vector<36x288xf32> to vector<36x288xbf16>
    %cst_79 = arith.constant dense<0.000000e+00> : vector<8x288xf32>
    %71 = tpu.matmul %68, %70, %cst_79 {dimension_numbers = #tpu.dot_dimension_numbers<[1], [0], [0], [1], [0, 0, 1, 1], [], []>} : vector<8x36xbf16>, vector<36x288xbf16>, vector<8x288xf32> -> vector<8x288xf32>
    %c0_80 = arith.constant 0 : index
    %c0_81 = arith.constant 0 : index
    %72 = vector.load %arg3[%c0_80, %c0_81] : memref<8x16xf32, #tpu.memory_space<vmem>>, vector<8x16xf32>
    %c0_82 = arith.constant 0 : index
    %c0_83 = arith.constant 0 : index
    %73 = vector.load %arg4[%c0_82, %c0_83] : memref<8x16xf32, #tpu.memory_space<vmem>>, vector<8x16xf32>
    %74 = vector.extract_strided_slice %71 {offsets = [0, 0], sizes = [8, 16], strides = [1, 1]} : vector<8x288xf32> to vector<8x16xf32>
    %75 = arith.mulf %74, %72 : vector<8x16xf32>
    %76 = arith.addf %75, %73 : vector<8x16xf32>
    %c0_84 = arith.constant 0 : index
    %c0_85 = arith.constant 0 : index
    %c0_86 = arith.constant 0 : index
    %77 = vector.load %arg5[%c0_84, %c0_85, %c0_86] : memref<1x8x256xf32, #tpu.memory_space<vmem>>, vector<1x8x16xf32>
    %78 = vector.shape_cast %77 : vector<1x8x16xf32> to vector<8x16xf32>
    %79 = vector.shape_cast %76 : vector<8x16xf32> to vector<1x8x16xf32>
    tpu.vector_store %arg5[%c0_84, %c0_85, %c0_86], %79 {strides = array<i32>} : memref<1x8x256xf32, #tpu.memory_space<vmem>>, vector<1x8x16xf32>,
    %80 = vector.extract_strided_slice %71 {offsets = [0, 18], sizes = [8, 16], strides = [1, 1]} : vector<8x288xf32> to vector<8x16xf32>
    %81 = arith.mulf %80, %72 : vector<8x16xf32>
    %82 = arith.addf %81, %73 : vector<8x16xf32>
    %c0_87 = arith.constant 0 : index
    %c0_88 = arith.constant 0 : index
    %c16_89 = arith.constant 16 : index
    %83 = vector.load %arg5[%c0_87, %c0_88, %c16_89] : memref<1x8x256xf32, #tpu.memory_space<vmem>>, vector<1x8x16xf32>
    %84 = vector.shape_cast %83 : vector<1x8x16xf32> to vector<8x16xf32>
    %85 = vector.shape_cast %82 : vector<8x16xf32> to vector<1x8x16xf32>
    tpu.vector_store %arg5[%c0_87, %c0_88, %c16_89], %85 {strides = array<i32>} : memref<1x8x256xf32, #tpu.memory_space<vmem>>, vector<1x8x16xf32>,
    %86 = vector.extract_strided_slice %71 {offsets = [0, 36], sizes = [8, 16], strides = [1, 1]} : vector<8x288xf32> to vector<8x16xf32>
    %87 = arith.mulf %86, %72 : vector<8x16xf32>
    %88 = arith.addf %87, %73 : vector<8x16xf32>
    %c0_90 = arith.constant 0 : index
    %c0_91 = arith.constant 0 : index
    %c32_92 = arith.constant 32 : index
    %89 = vector.load %arg5[%c0_90, %c0_91, %c32_92] : memref<1x8x256xf32, #tpu.memory_space<vmem>>, vector<1x8x16xf32>
    %90 = vector.shape_cast %89 : vector<1x8x16xf32> to vector<8x16xf32>
    %91 = vector.shape_cast %88 : vector<8x16xf32> to vector<1x8x16xf32>
    tpu.vector_store %arg5[%c0_90, %c0_91, %c32_92], %91 {strides = array<i32>} : memref<1x8x256xf32, #tpu.memory_space<vmem>>, vector<1x8x16xf32>,
    %92 = vector.extract_strided_slice %71 {offsets = [0, 54], sizes = [8, 16], strides = [1, 1]} : vector<8x288xf32> to vector<8x16xf32>
    %93 = arith.mulf %92, %72 : vector<8x16xf32>
    %94 = arith.addf %93, %73 : vector<8x16xf32>
    %c0_93 = arith.constant 0 : index
    %c0_94 = arith.constant 0 : index
    %c48_95 = arith.constant 48 : index
    %95 = vector.load %arg5[%c0_93, %c0_94, %c48_95] : memref<1x8x256xf32, #tpu.memory_space<vmem>>, vector<1x8x16xf32>
    %96 = vector.shape_cast %95 : vector<1x8x16xf32> to vector<8x16xf32>
    %97 = vector.shape_cast %94 : vector<8x16xf32> to vector<1x8x16xf32>
    tpu.vector_store %arg5[%c0_93, %c0_94, %c48_95], %97 {strides = array<i32>} : memref<1x8x256xf32, #tpu.memory_space<vmem>>, vector<1x8x16xf32>,
    %98 = vector.extract_strided_slice %71 {offsets = [0, 72], sizes = [8, 16], strides = [1, 1]} : vector<8x288xf32> to vector<8x16xf32>
    %99 = arith.mulf %98, %72 : vector<8x16xf32>
    %100 = arith.addf %99, %73 : vector<8x16xf32>
    %c0_96 = arith.constant 0 : index
    %c0_97 = arith.constant 0 : index
    %c64_98 = arith.constant 64 : index
    %101 = vector.load %arg5[%c0_96, %c0_97, %c64_98] : memref<1x8x256xf32, #tpu.memory_space<vmem>>, vector<1x8x16xf32>
    %102 = vector.shape_cast %101 : vector<1x8x16xf32> to vector<8x16xf32>
    %103 = vector.shape_cast %100 : vector<8x16xf32> to vector<1x8x16xf32>
    tpu.vector_store %arg5[%c0_96, %c0_97, %c64_98], %103 {strides = array<i32>} : memref<1x8x256xf32, #tpu.memory_space<vmem>>, vector<1x8x16xf32>,
    %104 = vector.extract_strided_slice %71 {offsets = [0, 90], sizes = [8, 16], strides = [1, 1]} : vector<8x288xf32> to vector<8x16xf32>
    %105 = arith.mulf %104, %72 : vector<8x16xf32>
    %106 = arith.addf %105, %73 : vector<8x16xf32>
    %c0_99 = arith.constant 0 : index
    %c0_100 = arith.constant 0 : index
    %c80_101 = arith.constant 80 : index
    %107 = vector.load %arg5[%c0_99, %c0_100, %c80_101] : memref<1x8x256xf32, #tpu.memory_space<vmem>>, vector<1x8x16xf32>
    %108 = vector.shape_cast %107 : vector<1x8x16xf32> to vector<8x16xf32>
    %109 = vector.shape_cast %106 : vector<8x16xf32> to vector<1x8x16xf32>
    tpu.vector_store %arg5[%c0_99, %c0_100, %c80_101], %109 {strides = array<i32>} : memref<1x8x256xf32, #tpu.memory_space<vmem>>, vector<1x8x16xf32>,
    %110 = vector.extract_strided_slice %71 {offsets = [0, 108], sizes = [8, 16], strides = [1, 1]} : vector<8x288xf32> to vector<8x16xf32>
    %111 = arith.mulf %110, %72 : vector<8x16xf32>
    %112 = arith.addf %111, %73 : vector<8x16xf32>
    %c0_102 = arith.constant 0 : index
    %c0_103 = arith.constant 0 : index
    %c96_104 = arith.constant 96 : index
    %113 = vector.load %arg5[%c0_102, %c0_103, %c96_104] : memref<1x8x256xf32, #tpu.memory_space<vmem>>, vector<1x8x16xf32>
    %114 = vector.shape_cast %113 : vector<1x8x16xf32> to vector<8x16xf32>
    %115 = vector.shape_cast %112 : vector<8x16xf32> to vector<1x8x16xf32>
    tpu.vector_store %arg5[%c0_102, %c0_103, %c96_104], %115 {strides = array<i32>} : memref<1x8x256xf32, #tpu.memory_space<vmem>>, vector<1x8x16xf32>,
    %116 = vector.extract_strided_slice %71 {offsets = [0, 126], sizes = [8, 16], strides = [1, 1]} : vector<8x288xf32> to vector<8x16xf32>
    %117 = arith.mulf %116, %72 : vector<8x16xf32>
    %118 = arith.addf %117, %73 : vector<8x16xf32>
    %c0_105 = arith.constant 0 : index
    %c0_106 = arith.constant 0 : index
    %c112_107 = arith.constant 112 : index
    %119 = vector.load %arg5[%c0_105, %c0_106, %c112_107] : memref<1x8x256xf32, #tpu.memory_space<vmem>>, vector<1x8x16xf32>
    %120 = vector.shape_cast %119 : vector<1x8x16xf32> to vector<8x16xf32>
    %121 = vector.shape_cast %118 : vector<8x16xf32> to vector<1x8x16xf32>
    tpu.vector_store %arg5[%c0_105, %c0_106, %c112_107], %121 {strides = array<i32>} : memref<1x8x256xf32, #tpu.memory_space<vmem>>, vector<1x8x16xf32>,
    %122 = vector.extract_strided_slice %71 {offsets = [0, 144], sizes = [8, 16], strides = [1, 1]} : vector<8x288xf32> to vector<8x16xf32>
    %123 = arith.mulf %122, %72 : vector<8x16xf32>
    %124 = arith.addf %123, %73 : vector<8x16xf32>
    %c0_108 = arith.constant 0 : index
    %c0_109 = arith.constant 0 : index
    %c128_110 = arith.constant 128 : index
    %125 = vector.load %arg5[%c0_108, %c0_109, %c128_110] : memref<1x8x256xf32, #tpu.memory_space<vmem>>, vector<1x8x16xf32>
    %126 = vector.shape_cast %125 : vector<1x8x16xf32> to vector<8x16xf32>
    %127 = vector.shape_cast %124 : vector<8x16xf32> to vector<1x8x16xf32>
    tpu.vector_store %arg5[%c0_108, %c0_109, %c128_110], %127 {strides = array<i32>} : memref<1x8x256xf32, #tpu.memory_space<vmem>>, vector<1x8x16xf32>,
    %128 = vector.extract_strided_slice %71 {offsets = [0, 162], sizes = [8, 16], strides = [1, 1]} : vector<8x288xf32> to vector<8x16xf32>
    %129 = arith.mulf %128, %72 : vector<8x16xf32>
    %130 = arith.addf %129, %73 : vector<8x16xf32>
    %c0_111 = arith.constant 0 : index
    %c0_112 = arith.constant 0 : index
    %c144_113 = arith.constant 144 : index
    %131 = vector.load %arg5[%c0_111, %c0_112, %c144_113] : memref<1x8x256xf32, #tpu.memory_space<vmem>>, vector<1x8x16xf32>
    %132 = vector.shape_cast %131 : vector<1x8x16xf32> to vector<8x16xf32>
    %133 = vector.shape_cast %130 : vector<8x16xf32> to vector<1x8x16xf32>
    tpu.vector_store %arg5[%c0_111, %c0_112, %c144_113], %133 {strides = array<i32>} : memref<1x8x256xf32, #tpu.memory_space<vmem>>, vector<1x8x16xf32>,
    %134 = vector.extract_strided_slice %71 {offsets = [0, 180], sizes = [8, 16], strides = [1, 1]} : vector<8x288xf32> to vector<8x16xf32>
    %135 = arith.mulf %134, %72 : vector<8x16xf32>
    %136 = arith.addf %135, %73 : vector<8x16xf32>
    %c0_114 = arith.constant 0 : index
    %c0_115 = arith.constant 0 : index
    %c160_116 = arith.constant 160 : index
    %137 = vector.load %arg5[%c0_114, %c0_115, %c160_116] : memref<1x8x256xf32, #tpu.memory_space<vmem>>, vector<1x8x16xf32>
    %138 = vector.shape_cast %137 : vector<1x8x16xf32> to vector<8x16xf32>
    %139 = vector.shape_cast %136 : vector<8x16xf32> to vector<1x8x16xf32>
    tpu.vector_store %arg5[%c0_114, %c0_115, %c160_116], %139 {strides = array<i32>} : memref<1x8x256xf32, #tpu.memory_space<vmem>>, vector<1x8x16xf32>,
    %140 = vector.extract_strided_slice %71 {offsets = [0, 198], sizes = [8, 16], strides = [1, 1]} : vector<8x288xf32> to vector<8x16xf32>
    %141 = arith.mulf %140, %72 : vector<8x16xf32>
    %142 = arith.addf %141, %73 : vector<8x16xf32>
    %c0_117 = arith.constant 0 : index
    %c0_118 = arith.constant 0 : index
    %c176_119 = arith.constant 176 : index
    %143 = vector.load %arg5[%c0_117, %c0_118, %c176_119] : memref<1x8x256xf32, #tpu.memory_space<vmem>>, vector<1x8x16xf32>
    %144 = vector.shape_cast %143 : vector<1x8x16xf32> to vector<8x16xf32>
    %145 = vector.shape_cast %142 : vector<8x16xf32> to vector<1x8x16xf32>
    tpu.vector_store %arg5[%c0_117, %c0_118, %c176_119], %145 {strides = array<i32>} : memref<1x8x256xf32, #tpu.memory_space<vmem>>, vector<1x8x16xf32>,
    %146 = vector.extract_strided_slice %71 {offsets = [0, 216], sizes = [8, 16], strides = [1, 1]} : vector<8x288xf32> to vector<8x16xf32>
    %147 = arith.mulf %146, %72 : vector<8x16xf32>
    %148 = arith.addf %147, %73 : vector<8x16xf32>
    %c0_120 = arith.constant 0 : index
    %c0_121 = arith.constant 0 : index
    %c192_122 = arith.constant 192 : index
    %149 = vector.load %arg5[%c0_120, %c0_121, %c192_122] : memref<1x8x256xf32, #tpu.memory_space<vmem>>, vector<1x8x16xf32>
    %150 = vector.shape_cast %149 : vector<1x8x16xf32> to vector<8x16xf32>
    %151 = vector.shape_cast %148 : vector<8x16xf32> to vector<1x8x16xf32>
    tpu.vector_store %arg5[%c0_120, %c0_121, %c192_122], %151 {strides = array<i32>} : memref<1x8x256xf32, #tpu.memory_space<vmem>>, vector<1x8x16xf32>,
    %152 = vector.extract_strided_slice %71 {offsets = [0, 234], sizes = [8, 16], strides = [1, 1]} : vector<8x288xf32> to vector<8x16xf32>
    %153 = arith.mulf %152, %72 : vector<8x16xf32>
    %154 = arith.addf %153, %73 : vector<8x16xf32>
    %c0_123 = arith.constant 0 : index
    %c0_124 = arith.constant 0 : index
    %c208_125 = arith.constant 208 : index
    %155 = vector.load %arg5[%c0_123, %c0_124, %c208_125] : memref<1x8x256xf32, #tpu.memory_space<vmem>>, vector<1x8x16xf32>
    %156 = vector.shape_cast %155 : vector<1x8x16xf32> to vector<8x16xf32>
    %157 = vector.shape_cast %154 : vector<8x16xf32> to vector<1x8x16xf32>
    tpu.vector_store %arg5[%c0_123, %c0_124, %c208_125], %157 {strides = array<i32>} : memref<1x8x256xf32, #tpu.memory_space<vmem>>, vector<1x8x16xf32>,
    %158 = vector.extract_strided_slice %71 {offsets = [0, 252], sizes = [8, 16], strides = [1, 1]} : vector<8x288xf32> to vector<8x16xf32>
    %159 = arith.mulf %158, %72 : vector<8x16xf32>
    %160 = arith.addf %159, %73 : vector<8x16xf32>
    %c0_126 = arith.constant 0 : index
    %c0_127 = arith.constant 0 : index
    %c224_128 = arith.constant 224 : index
    %161 = vector.load %arg5[%c0_126, %c0_127, %c224_128] : memref<1x8x256xf32, #tpu.memory_space<vmem>>, vector<1x8x16xf32>
    %162 = vector.shape_cast %161 : vector<1x8x16xf32> to vector<8x16xf32>
    %163 = vector.shape_cast %160 : vector<8x16xf32> to vector<1x8x16xf32>
    tpu.vector_store %arg5[%c0_126, %c0_127, %c224_128], %163 {strides = array<i32>} : memref<1x8x256xf32, #tpu.memory_space<vmem>>, vector<1x8x16xf32>,
    %164 = vector.extract_strided_slice %71 {offsets = [0, 270], sizes = [8, 16], strides = [1, 1]} : vector<8x288xf32> to vector<8x16xf32>
    %165 = arith.mulf %164, %72 : vector<8x16xf32>
    %166 = arith.addf %165, %73 : vector<8x16xf32>
    %c0_129 = arith.constant 0 : index
    %c0_130 = arith.constant 0 : index
    %c240_131 = arith.constant 240 : index
    %167 = vector.load %arg5[%c0_129, %c0_130, %c240_131] : memref<1x8x256xf32, #tpu.memory_space<vmem>>, vector<1x8x16xf32>
    %168 = vector.shape_cast %167 : vector<1x8x16xf32> to vector<8x16xf32>
    %169 = vector.shape_cast %166 : vector<8x16xf32> to vector<1x8x16xf32>
    tpu.vector_store %arg5[%c0_129, %c0_130, %c240_131], %169 {strides = array<i32>} : memref<1x8x256xf32, #tpu.memory_space<vmem>>, vector<1x8x16xf32>,
    return
  }
  func.func @transform_0(%arg0: i32) -> (i32, i32, i32) {
    %c0_i32 = arith.constant 0 : i32
    %c0_i32_0 = arith.constant 0 : i32
    %c0_i32_1 = arith.constant 0 : i32
    return %arg0, %c0_i32, %c0_i32_0 : i32, i32, i32
  }
  func.func @transform_1(%arg0: i32) -> (i32, i32) {
    %c0_i32 = arith.constant 0 : i32
    %c0_i32_0 = arith.constant 0 : i32
    %c0_i32_1 = arith.constant 0 : i32
    return %c0_i32, %c0_i32_0 : i32, i32
  }
  func.func @transform_2(%arg0: i32) -> (i32, i32) {
    %c0_i32 = arith.constant 0 : i32
    %c0_i32_0 = arith.constant 0 : i32
    %c0_i32_1 = arith.constant 0 : i32
    return %c0_i32, %c0_i32_0 : i32, i32
  }
  func.func @transform_3(%arg0: i32) -> (i32, i32) {
    %c0_i32 = arith.constant 0 : i32
    %c0_i32_0 = arith.constant 0 : i32
    %c0_i32_1 = arith.constant 0 : i32
    return %c0_i32, %c0_i32_0 : i32, i32
  }
  func.func @transform_4(%arg0: i32) -> (i32, i32, i32) {
    %c0_i32 = arith.constant 0 : i32
    %c0_i32_0 = arith.constant 0 : i32
    %c0_i32_1 = arith.constant 0 : i32
    return %arg0, %c0_i32, %c0_i32_0 : i32, i32, i32
  }
}

</mosaic_0001>

<llo_original>
// kernel: voice_conv2d.1
$region0: #{voice_conv2d.1}
  #allocation0 [shape = 'u32[]', space=smem, size = 0x4, offset = 0x4, fixed_abs, tag = 'smem constant byte address 0x4 - core index']
  #allocation1 [shape = 'u32[72,128]{1,0:T(1,128)}', space=vmem, size = 0x9000, scoped, tag = 'internal scratch']
  #allocation2 [shape = 'f32[4,326]{1,0:T(4,128)}', space=vmem, size = 0x1800, scoped, tag = 'scratch operand']
  #allocation3 [shape = 'f32[36,288]{1,0:T(8,128)}', space=vmem, size = 0xf000, scoped, tag = 'scratch operand']
  %s0 = inlined_call_operand.vmem [shape: f32[2,4,256], index: 0, kind: input, shape index: {}]
  %s1 = inlined_call_operand.vmem [shape: bf16[8,36], index: 1, kind: input, shape index: {}]
  %s2 = inlined_call_operand.vmem [shape: f32[8,16], index: 2, kind: input, shape index: {}]
  %s3 = inlined_call_operand.vmem [shape: f32[8,16], index: 3, kind: input, shape index: {}]
  %s4 = inlined_call_operand.vmem [shape: f32[2,8,256], index: 4, kind: output, shape index: {}]
  %s5 = sld [smem:[#allocation0]]
  $region49: #{voice_conv2d.1} parent=0
    _
  %s7 = ssub.s32 1, %s5
  %s8 = scalar_select 0, %s7, %s5
  loop: start=0, step=1, limit=4
  $region2: #{voice_conv2d.1} parent=0 // loop_pre_header
    _
  $region3: #{voice_conv2d.1} parent=0 // loop_header
    %s10 = sphi 0, %s14
    %p11 = scmp.ge.s32.totalorder %s10, 4
    %s20 = sphi 0, %s22
    %s23 = sphi 0, %s20
    %s24 = sphi 0, %s23
    %s40 = sphi 0, %s24
    %s44 = sphi 0, %s44
    %s46 = sphi 0, %s44
    %s47 = sphi 0, %s46
    %s61 = sphi 0, %s47
    %s65 = sphi 0, %s65
    %s67 = sphi 0, %s65
    %s68 = sphi 0, %s67
    %s82 = sphi 0, %s68
    %s86 = sphi 0, %s86
    %s88 = sphi 0, %s86
    %s89 = sphi 0, %s88
    %s103 = sphi 0, %s89
    %s109 = sphi 0, %s111
    %s112 = sphi 0, %s109
    %s113 = sphi 0, %s112
    %s129 = sphi 0, %s113
  $region4: #{voice_conv2d.1} parent=0 // loop_header_branch
    %13 = sbr.rel (%p11) target = $region8
  $region5: #{voice_conv2d.1} parent=0 // loop_body
    %s15 = ssub.s32 %s10, 1
    %s16 = ssub.s32 %s10, 2
    %s17 = sadd.s32 %s10, 1
    %s18 = ssub.s32 %s10, %s17
    %p19 = scmp.eq.s32.totalorder %s18, 0
    %s21 = sadd.s32 %s20, 1
    %s22 = scalar_select %p19, %s20, %s21
    %p25 = pneg %p19
    %p26 = scmp.eq.s32.totalorder %s10, 1
    %p27 = por %p25, %p26
    %p28 = scmp.ne.s32.totalorder %s20, %s23
    %p29 = scmp.eq.s32.totalorder %s10, 0
    %p30 = por %p28, %p29
    %p31 = scmp.ne.s32.totalorder %s20, %s23
    %p32 = scmp.eq.s32.totalorder %s15, 1
    %p33 = por %p31, %p32
    %p34 = scmp.ne.s32.totalorder %s23, %s24
    %p35 = scmp.eq.s32.totalorder %s15, 0
    %p36 = por %p34, %p35
    %p37 = scmp.ne.s32.totalorder %s23, %s24
    %p38 = scmp.eq.s32.totalorder %s16, 1
    %p39 = por %p37, %p38
    %p41 = scmp.ne.s32.totalorder %s24, %s40
    %p42 = scmp.eq.s32.totalorder %s16, 0
    %p43 = por %p41, %p42
    %s45 = sadd.s32 %s44, 1
    %p48 = scmp.eq.s32.totalorder %s10, 1
    %p49 = scmp.ne.s32.totalorder %s44, %s46
    %p50 = scmp.eq.s32.totalorder %s10, 0
    %p51 = por %p49, %p50
    %p52 = scmp.ne.s32.totalorder %s44, %s46
    %p53 = scmp.eq.s32.totalorder %s15, 1
    %p54 = por %p52, %p53
    %p55 = scmp.ne.s32.totalorder %s46, %s47
    %p56 = scmp.eq.s32.totalorder %s15, 0
    %p57 = por %p55, %p56
    %p58 = scmp.ne.s32.totalorder %s46, %s47
    %p59 = scmp.eq.s32.totalorder %s16, 1
    %p60 = por %p58, %p59
    %p62 = scmp.ne.s32.totalorder %s47, %s61
    %p63 = scmp.eq.s32.totalorder %s16, 0
    %p64 = por %p62, %p63
    %s66 = sadd.s32 %s65, 1
    %p69 = scmp.eq.s32.totalorder %s10, 1
    %p70 = scmp.ne.s32.totalorder %s65, %s67
    %p71 = scmp.eq.s32.totalorder %s10, 0
    %p72 = por %p70, %p71
    %p73 = scmp.ne.s32.totalorder %s65, %s67
    %p74 = scmp.eq.s32.totalorder %s15, 1
    %p75 = por %p73, %p74
    %p76 = scmp.ne.s32.totalorder %s67, %s68
    %p77 = scmp.eq.s32.totalorder %s15, 0
    %p78 = por %p76, %p77
    %p79 = scmp.ne.s32.totalorder %s67, %s68
    %p80 = scmp.eq.s32.totalorder %s16, 1
    %p81 = por %p79, %p80
    %p83 = scmp.ne.s32.totalorder %s68, %s82
    %p84 = scmp.eq.s32.totalorder %s16, 0
    %p85 = por %p83, %p84
    %s87 = sadd.s32 %s86, 1
    %p90 = scmp.eq.s32.totalorder %s10, 1
    %p91 = scmp.ne.s32.totalorder %s86, %s88
    %p92 = scmp.eq.s32.totalorder %s10, 0
    %p93 = por %p91, %p92
    %p94 = scmp.ne.s32.totalorder %s86, %s88
    %p95 = scmp.eq.s32.totalorder %s15, 1
    %p96 = por %p94, %p95
    %p97 = scmp.ne.s32.totalorder %s88, %s89
    %p98 = scmp.eq.s32.totalorder %s15, 0
    %p99 = por %p97, %p98
    %p100 = scmp.ne.s32.totalorder %s88, %s89
    %p101 = scmp.eq.s32.totalorder %s16, 1
    %p102 = por %p100, %p101
    %p104 = scmp.ne.s32.totalorder %s89, %s103
    %p105 = scmp.eq.s32.totalorder %s16, 0
    %p106 = por %p104, %p105
    %s107 = ssub.s32 %s10, %s17
    %p108 = scmp.eq.s32.totalorder %s107, 0
    %s110 = sadd.s32 %s109, 1
    %s111 = scalar_select %p108, %s109, %s110
    %p114 = pneg %p108
    %p115 = scmp.eq.s32.totalorder %s10, 1
    %p116 = por %p114, %p115
    %p117 = scmp.ne.s32.totalorder %s109, %s112
    %p118 = scmp.eq.s32.totalorder %s10, 0
    %p119 = por %p117, %p118
    %p120 = scmp.ne.s32.totalorder %s109, %s112
    %p121 = scmp.eq.s32.totalorder %s15, 1
    %p122 = por %p120, %p121
    %p123 = scmp.ne.s32.totalorder %s112, %s113
    %p124 = scmp.eq.s32.totalorder %s15, 0
    %p125 = por %p123, %p124
    %p126 = scmp.ne.s32.totalorder %s112, %s113
    %p127 = scmp.eq.s32.totalorder %s16, 1
    %p128 = por %p126, %p127
    %p130 = scmp.ne.s32.totalorder %s113, %s129
    %p131 = scmp.eq.s32.totalorder %s16, 0
    %p132 = por %p130, %p131
    %p133 = scmp.le.s32.totalorder 1, %s10
    %p134 = scmp.lt.s32.totalorder %s10, 3
    %p135 = pnand %p133, %p134
    %p136 = pneg %p135
    // Predicated region
    $region9: #{voice_conv2d.1} parent=5 // pred_check
      _
    $region10: #{voice_conv2d.1} parent=5 // pred_check_branch
      %138 = sbr.rel (%p135) target = $region12
    $region11: #{voice_conv2d.1} parent=5 // pred_region
      %s139 = ssub.s32 %s10, 1
      // Predicated region
      $region13: #{voice_conv2d.1} parent=11 // pred_check
        %p140 = pneg %p57
      $region14: #{voice_conv2d.1} parent=11 // pred_check_branch
        %142 = sbr.rel (%p140) target = $region16
      $region15: #{voice_conv2d.1} parent=11 // pred_region
        _
      $region16: #{voice_conv2d.1} parent=11 // pred_fallthru
        _
      // Predicated region
      $region17: #{voice_conv2d.1} parent=11 // pred_check
        %p143 = pneg %p78
      $region18: #{voice_conv2d.1} parent=11 // pred_check_branch
        %145 = sbr.rel (%p143) target = $region20
      $region19: #{voice_conv2d.1} parent=11 // pred_region
        _
      $region20: #{voice_conv2d.1} parent=11 // pred_fallthru
        _
      // Predicated region
      $region21: #{voice_conv2d.1} parent=11 // pred_check
        %p146 = pneg %p99
      $region22: #{voice_conv2d.1} parent=11 // pred_check_branch
        %148 = sbr.rel (%p146) target = $region24
      $region23: #{voice_conv2d.1} parent=11 // pred_region
        _
      $region24: #{voice_conv2d.1} parent=11 // pred_fallthru
        _
    $region12: #{voice_conv2d.1} parent=5 // pred_fallthru
      _
    %p149 = scmp.lt.s32.totalorder %s10, 2
    // Predicated region
    $region25: #{voice_conv2d.1} parent=5 // pred_check
      %p150 = pneg %p149
    $region26: #{voice_conv2d.1} parent=5 // pred_check_branch
      %152 = sbr.rel (%p150) target = $region28
    $region27: #{voice_conv2d.1} parent=5 // pred_region
      // Predicated region
      $region29: #{voice_conv2d.1} parent=27 // pred_check
        %p153 = pneg %p30
      $region30: #{voice_conv2d.1} parent=27 // pred_check_branch
        %155 = sbr.rel (%p153) target = $region32
      $region31: #{voice_conv2d.1} parent=27 // pred_region
        %p156 = scmp.lt.s32.totalorder %s10, 1
        %s157 = scalar_select %p156, %s10, 1
        %s158 = smul.addr %s157, 2
        %s159 = smul.addr %s158, 4
        %s160 = scalar_lea.vmem %s0, %s159
      $region32: #{voice_conv2d.1} parent=27 // pred_fallthru
        _
    $region28: #{voice_conv2d.1} parent=5 // pred_fallthru
      _
    %p161 = scmp.le.s32.totalorder 1, %s10
    %p162 = scmp.lt.s32.totalorder %s10, 3
    %p163 = pnand %p161, %p162
    %p164 = pneg %p163
    // Predicated region
    $region33: #{voice_conv2d.1} parent=5 // pred_check
      _
    $region34: #{voice_conv2d.1} parent=5 // pred_check_branch
      %166 = sbr.rel (%p163) target = $region36
    $region35: #{voice_conv2d.1} parent=5 // pred_region
      %s167 = ssub.s32 %s10, 1
      %p168 = scmp.lt.s32.totalorder %s15, 1
      %s169 = scalar_select %p168, %s15, 1
      %s170 = smul.addr %s169, 2
      %s171 = smul.addr %s170, 4
      %s172 = scalar_lea.vmem %s0, %s171
      %p173 = pneg %p36
      %p174 = pneg %p33
      %p175 = pneg %p57
      %p176 = pneg %p54
      %p177 = pneg %p78
      %p178 = pneg %p75
      %p179 = pneg %p99
      %p180 = pneg %p96
      %p181 = pneg %p125
      %p182 = pneg %p122
      %p183 = scmp.lt.s32.totalorder %s15, 1
      %s184 = scalar_select %p183, %s15, 1
      %s185 = smul.addr %s184, 2
      %s186 = smul.addr %s185, 8
      %s187 = scalar_lea.vmem %s4, %s186
      %p188 = scmp.lt.s32.totalorder %s15, 1
      %s189 = scalar_select %p188, %s15, 1
      %s190 = smul.addr %s189, 2
      %s191 = smul.addr %s190, 4
      %s192 = scalar_lea.vmem %s0, %s191
      %p193 = scmp.lt.s32.totalorder %s15, 1
      %s194 = scalar_select %p193, %s15, 1
      %s195 = smul.addr %s194, 2
      %s196 = smul.addr %s195, 8
      %s197 = scalar_lea.vmem %s4, %s196
      %199 = vst [vmem:[#allocation2] sm:$0xff] 0.0
      %vm200 = vcmask 568320
      %201 = vst.msk [vmem:[#allocation2 + $0x8] sm:$0xf] %vm200, 0.0
      %v202 = vld [vmem:[%s192] sm:$0xf]
      %204 = vrot.lane.b32.xlu0 %v202, 19
      %v205 = vpop.permute.xlu0 %204
      %vm207 = vcmask 281752
      %208 = vst.msk [vmem:[#allocation2] sm:$0xf] %vm207, %v205
      %v209 = vld [vmem:[%s192] sm:$0xf]
      %211 = vrot.lane.b32.xlu0 %v209, 21
      %v212 = vpop.permute.xlu0 %211
      %vm214 = vcmask 429352
      %215 = vst.msk [vmem:[#allocation2] sm:$0xf] %vm214, %v212
      %v216 = vld [vmem:[%s192] sm:$0xf]
      %218 = vrot.lane.b32.xlu0 %v216, 23
      %v219 = vpop.permute.xlu0 %218
      %vm221 = vcmask 576952
      %222 = vst.msk [vmem:[#allocation2] sm:$0xf] %vm221, %v219
      %v223 = vld [vmem:[%s192] sm:$0xf]
      %225 = vrot.lane.b32.xlu0 %v223, 25
      %v226 = vpop.permute.xlu0 %225
      %vm228 = vcmask 724552
      %229 = vst.msk [vmem:[#allocation2] sm:$0xf] %vm228, %v226
      %v230 = vld [vmem:[%s192] sm:$0xf]
      %232 = vrot.lane.b32.xlu0 %v230, 27
      %v233 = vpop.permute.xlu0 %232
      %vm235 = vcmask 872152
      %236 = vst.msk [vmem:[#allocation2] sm:$0xf] %vm235, %v233
      %v237 = vld [vmem:[%s192] sm:$0xf]
      %239 = vrot.lane.b32.xlu0 %v237, 29
      %v240 = vpop.permute.xlu0 %239
      %vm242 = vcmask 1019752
      %243 = vst.msk [vmem:[#allocation2] sm:$0xf] %vm242, %v240
      %v244 = vld [vmem:[%s192] sm:$0xf]
      %246 = vrot.lane.b32.xlu0 %v244, 31
      %v247 = vpop.permute.xlu0 %246
      %v248 = vrot.slane %v247, 4
      %vm249 = vcmask 252928
      %v250 = vsel %vm249, %v248, %v247
      %vm252 = vcmask 1044472
      %vm253 = vcmask 121860
      %vm254 = vmor %vm253, %vm252
      %255 = vst.msk [vmem:[#allocation2] sm:$0xff] %vm254, %v250
      %v256 = vld [vmem:[%s192] sm:$0xf]
      %258 = vrot.lane.b32.xlu0 %v256, 33
      %v259 = vpop.permute.xlu0 %258
      %vm261 = vcmask 265352
      %262 = vst.msk [vmem:[#allocation2 + $0x4] sm:$0xf] %vm261, %v259
      %v263 = vld [vmem:[%s192 + $0x4] sm:$0xf]
      %265 = vrot.lane.b32.xlu0 %v263, 35
      %v266 = vpop.permute.xlu0 %265
      %vm268 = vcmask 412952
      %269 = vst.msk [vmem:[#allocation2 + $0x4] sm:$0xf] %vm268, %v266
      %v270 = vld [vmem:[%s192 + $0x4] sm:$0xf]
      %272 = vrot.lane.b32.xlu0 %v270, 37
      %v273 = vpop.permute.xlu0 %272
      %vm275 = vcmask 560552
      %276 = vst.msk [vmem:[#allocation2 + $0x4] sm:$0xf] %vm275, %v273
      %v277 = vld [vmem:[%s192 + $0x4] sm:$0xf]
      %279 = vrot.lane.b32.xlu0 %v277, 39
      %v280 = vpop.permute.xlu0 %279
      %vm282 = vcmask 708152
      %283 = vst.msk [vmem:[#allocation2 + $0x4] sm:$0xf] %vm282, %v280
      %v284 = vld [vmem:[%s192 + $0x4] sm:$0xf]
      %286 = vrot.lane.b32.xlu0 %v284, 41
      %v287 = vpop.permute.xlu0 %286
      %vm289 = vcmask 855752
      %290 = vst.msk [vmem:[#allocation2 + $0x4] sm:$0xf] %vm289, %v287
      %v291 = vld [vmem:[%s192 + $0x4] sm:$0xf]
      %293 = vrot.lane.b32.xlu0 %v291, 43
      %v294 = vpop.permute.xlu0 %293
      %vm296 = vcmask 1003352
      %297 = vst.msk [vmem:[#allocation2 + $0x4] sm:$0xf] %vm296, %v294
      %v298 = vld [vmem:[%s192 + $0x4] sm:$0xf]
      %300 = vrot.lane.b32.xlu0 %v298, 45
      %v301 = vpop.permute.xlu0 %300
      %v302 = vrot.slane %v301, 4
      %vm303 = vcmask 367616
      %v304 = vsel %vm303, %v302, %v301
      %vm306 = vcmask 1044456
      %vm307 = vcmask 105476
      %vm308 = vmor %vm307, %vm306
      %309 = vst.msk [vmem:[#allocation2 + $0x4] sm:$0xff] %vm308, %v304
      %v310 = vld [vmem:[%s192 + $0x4] sm:$0xf]
      %312 = vrot.lane.b32.xlu0 %v310, 47
      %v313 = vpop.permute.xlu0 %312
      %vm315 = vcmask 248952
      %316 = vst.msk [vmem:[#allocation2 + $0x8] sm:$0xf] %vm315, %v313
      %v317 = vld [vmem:[%s192 + $0x4] sm:$0xf]
      %319 = vrot.lane.b32.xlu0 %v317, 49
      %v320 = vpop.permute.xlu0 %319
      %vm322 = vcmask 396552
      %323 = vst.msk [vmem:[#allocation2 + $0x8] sm:$0xf] %vm322, %v320
      %v324 = vld [vmem:[#allocation2] sm:$0xff]
      %v325 = vld [vmem:[#allocation2 + $0x8] sm:$0xf]
      %328 = vst [vmem:[#allocation1] ss:$2 sm:$0xff] %v324
      %s329 = scalar_lea.vmem [#allocation1], 16
      %330 = vst [vmem:[%s329] ss:$2 sm:$0xff] %v325
      %v331 = vld.sshfl [vmem:[#allocation1] sm:$0xff pattern:$0x75316420]
      %v332 = vld.sshfl [vmem:[#allocation1 + $0x8] sm:$0xff pattern:$0x75316420]
      %v333 = vld.sshfl [vmem:[#allocation1 + $0x10] sm:$0xff pattern:$0x75316420]
      %337 = vst [vmem:[#allocation3] sm:$0xf] %v331
      %338 = vst [vmem:[#allocation3 + $0x8] sm:$0xf] %v332
      %vm339 = vcmask 257024
      %340 = vst.msk [vmem:[#allocation3 + $0x10] sm:$0xf] %vm339, %v333
      %v341 = vld [vmem:[#allocation2] sm:$0xff]
      %v342 = vld [vmem:[#allocation2 + $0x8] sm:$0xf]
      %s345 = scalar_lea.vmem [#allocation1], 1
      %346 = vst [vmem:[%s345] ss:$2 sm:$0xff] %v341
      %s347 = scalar_lea.vmem [#allocation1], 17
      %348 = vst [vmem:[%s347] ss:$2 sm:$0xff] %v342
      %v349 = vld.sshfl [vmem:[#allocation1] sm:$0xff pattern:$0x75316420]
      %v350 = vld.sshfl [vmem:[#allocation1 + $0x8] sm:$0xff pattern:$0x75316420]
      %v351 = vld.sshfl [vmem:[#allocation1 + $0x10] sm:$0xff pattern:$0x75316420]
      %352 = vrot.lane.b32.xlu0 %v349, 127
      %v353 = vpop.permute.xlu0 %352
      %354 = vrot.lane.b32.xlu0 %v350, 127
      %v355 = vpop.permute.xlu0 %354
      %356 = vrot.lane.b32.xlu0 %v351, 127
      %v357 = vpop.permute.xlu0 %356
      %vm358 = vcmask 1039360
      %v359 = vsel %vm358, %v353, %v355
      %v360 = vsel %vm358, %v355, %v357
      %364 = vst [vmem:[#allocation3] sm:$0xf0] %v359
      %365 = vst [vmem:[#allocation3 + $0x8] sm:$0xf0] %v360
      %vm366 = vcmask 261124
      %367 = vst.msk [vmem:[#allocation3 + $0x10] sm:$0xf0] %vm366, %v357
      %v368 = vld [vmem:[#allocation2] sm:$0xff]
      %v369 = vld [vmem:[#allocation2 + $0x8] sm:$0xf]
      %372 = vst [vmem:[#allocation1] ss:$2 sm:$0xff] %v368
      %s373 = scalar_lea.vmem [#allocation1], 16
      %374 = vst [vmem:[%s373] ss:$2 sm:$0xff] %v369
      %v375 = vld.sshfl [vmem:[#allocation1] sm:$0xff pattern:$0x75316420]
      %v376 = vld.sshfl [vmem:[#allocation1 + $0x8] sm:$0xff pattern:$0x75316420]
      %v377 = vld.sshfl [vmem:[#allocation1 + $0x10] sm:$0xff pattern:$0x75316420]
      %378 = vrot.lane.b32.xlu0 %v375, 126
      %v379 = vpop.permute.xlu0 %378
      %380 = vrot.lane.b32.xlu0 %v376, 126
      %v381 = vpop.permute.xlu0 %380
      %382 = vrot.lane.b32.xlu0 %v377, 126
      %v383 = vpop.permute.xlu0 %382
      %vm384 = vcmask 1031168
      %v385 = vsel %vm384, %v379, %v381
      %v386 = vsel %vm384, %v381, %v383
      %390 = vst [vmem:[#allocation3 + $0x18] sm:$0xf] %v385
      %391 = vst [vmem:[#allocation3 + $0x20] sm:$0xf] %v386
      %392 = vst.msk [vmem:[#allocation3 + $0x28] sm:$0xf] %vm339, %v383
      %v393 = vld [vmem:[#allocation2] sm:$0xff]
      %v394 = vld [vmem:[#allocation2 + $0x8] sm:$0xf]
      %s397 = scalar_lea.vmem [#allocation1], 1
      %398 = vst [vmem:[%s397] ss:$2 sm:$0xff] %v393
      %s399 = scalar_lea.vmem [#allocation1], 17
      %400 = vst [vmem:[%s399] ss:$2 sm:$0xff] %v394
      %v401 = vld.sshfl [vmem:[#allocation1] sm:$0xff pattern:$0x75316420]
      %v402 = vld.sshfl [vmem:[#allocation1 + $0x8] sm:$0xff pattern:$0x75316420]
      %v403 = vld.sshfl [vmem:[#allocation1 + $0x10] sm:$0xff pattern:$0x75316420]
      %404 = vrot.lane.b32.xlu0 %v401, 110
      %v405 = vpop.permute.xlu0 %404
      %406 = vrot.lane.b32.xlu0 %v402, 110
      %v407 = vpop.permute.xlu0 %406
      %408 = vrot.lane.b32.xlu0 %v403, 110
      %v409 = vpop.permute.xlu0 %408
      %vm410 = vcmask 900096
      %v411 = vsel %vm410, %v405, %v407
      %v412 = vsel %vm410, %v407, %v409
      %416 = vst [vmem:[#allocation3 + $0x18] sm:$0xf0] %v411
      %417 = vst [vmem:[#allocation3 + $0x20] sm:$0xf0] %v412
      %418 = vst.msk [vmem:[#allocation3 + $0x28] sm:$0xf0] %vm366, %v409
      %v419 = vld [vmem:[#allocation2] sm:$0xff]
      %v420 = vld [vmem:[#allocation2 + $0x8] sm:$0xf]
      %423 = vst [vmem:[#allocation1] ss:$2 sm:$0xff] %v419
      %s424 = scalar_lea.vmem [#allocation1], 16
      %425 = vst [vmem:[%s424] ss:$2 sm:$0xff] %v420
      %v426 = vld.sshfl [vmem:[#allocation1] sm:$0xff pattern:$0x75316420]
      %v427 = vld.sshfl [vmem:[#allocation1 + $0x8] sm:$0xff pattern:$0x75316420]
      %v428 = vld.sshfl [vmem:[#allocation1 + $0x10] sm:$0xff pattern:$0x75316420]
      %429 = vrot.lane.b32.xlu0 %v426, 109
      %v430 = vpop.permute.xlu0 %429
      %431 = vrot.lane.b32.xlu0 %v427, 109
      %v432 = vpop.permute.xlu0 %431
      %433 = vrot.lane.b32.xlu0 %v428, 109
      %v434 = vpop.permute.xlu0 %433
      %vm435 = vcmask 891904
      %v436 = vsel %vm435, %v430, %v432
      %v437 = vsel %vm435, %v432, %v434
      %441 = vst [vmem:[#allocation3 + $0x30] sm:$0xf] %v436
      %442 = vst [vmem:[#allocation3 + $0x38] sm:$0xf] %v437
      %443 = vst.msk [vmem:[#allocation3 + $0x40] sm:$0xf] %vm339, %v434
      %v444 = vld [vmem:[#allocation2] sm:$0xff]
      %v445 = vld [vmem:[#allocation2 + $0x8] sm:$0xf]
      %s448 = scalar_lea.vmem [#allocation1], 1
      %449 = vst [vmem:[%s448] ss:$2 sm:$0xff] %v444
      %s450 = scalar_lea.vmem [#allocation1], 17
      %451 = vst [vmem:[%s450] ss:$2 sm:$0xff] %v445
      %v452 = vld.sshfl [vmem:[#allocation1] sm:$0xff pattern:$0x75316420]
      %v453 = vld.sshfl [vmem:[#allocation1 + $0x8] sm:$0xff pattern:$0x75316420]
      %v454 = vld.sshfl [vmem:[#allocation1 + $0x10] sm:$0xff pattern:$0x75316420]
      %455 = vrot.lane.b32.xlu0 %v452, 108
      %v456 = vpop.permute.xlu0 %455
      %457 = vrot.lane.b32.xlu0 %v453, 108
      %v458 = vpop.permute.xlu0 %457
      %459 = vrot.lane.b32.xlu0 %v454, 108
      %v460 = vpop.permute.xlu0 %459
      %vm461 = vcmask 883712
      %v462 = vsel %vm461, %v456, %v458
      %v463 = vsel %vm461, %v458, %v460
      %467 = vst [vmem:[#allocation3 + $0x30] sm:$0xf0] %v462
      %468 = vst [vmem:[#allocation3 + $0x38] sm:$0xf0] %v463
      %469 = vst.msk [vmem:[#allocation3 + $0x40] sm:$0xf0] %vm366, %v460
      %v470 = vld [vmem:[#allocation2] sm:$0xff]
      %v471 = vld [vmem:[#allocation2 + $0x8] sm:$0xf]
      %474 = vst [vmem:[#allocation1] ss:$2 sm:$0xff] %v470
      %s475 = scalar_lea.vmem [#allocation1], 16
      %476 = vst [vmem:[%s475] ss:$2 sm:$0xff] %v471
      %v477 = vld.sshfl [vmem:[#allocation1] sm:$0xff pattern:$0x75316420]
      %v478 = vld.sshfl [vmem:[#allocation1 + $0x8] sm:$0xff pattern:$0x75316420]
      %v479 = vld.sshfl [vmem:[#allocation1 + $0x10] sm:$0xff pattern:$0x75316420]
      %480 = vrot.lane.b32.xlu0 %v477, 92
      %v481 = vpop.permute.xlu0 %480
      %482 = vrot.lane.b32.xlu0 %v478, 92
      %v483 = vpop.permute.xlu0 %482
      %484 = vrot.lane.b32.xlu0 %v479, 92
      %v485 = vpop.permute.xlu0 %484
      %vm486 = vcmask 752640
      %v487 = vsel %vm486, %v481, %v483
      %v488 = vsel %vm486, %v483, %v485
      %492 = vst [vmem:[#allocation3 + $0x48] sm:$0xf] %v487
      %493 = vst [vmem:[#allocation3 + $0x50] sm:$0xf] %v488
      %494 = vst.msk [vmem:[#allocation3 + $0x58] sm:$0xf] %vm339, %v485
      %v495 = vld [vmem:[#allocation2] sm:$0xff]
      %v496 = vld [vmem:[#allocation2 + $0x8] sm:$0xf]
      %s499 = scalar_lea.vmem [#allocation1], 1
      %500 = vst [vmem:[%s499] ss:$2 sm:$0xff] %v495
      %s501 = scalar_lea.vmem [#allocation1], 17
      %502 = vst [vmem:[%s501] ss:$2 sm:$0xff] %v496
      %v503 = vld.sshfl [vmem:[#allocation1] sm:$0xff pattern:$0x75316420]
      %v504 = vld.sshfl [vmem:[#allocation1 + $0x8] sm:$0xff pattern:$0x75316420]
      %v505 = vld.sshfl [vmem:[#allocation1 + $0x10] sm:$0xff pattern:$0x75316420]
      %506 = vrot.lane.b32.xlu0 %v503, 91
      %v507 = vpop.permute.xlu0 %506
      %508 = vrot.lane.b32.xlu0 %v504, 91
      %v509 = vpop.permute.xlu0 %508
      %510 = vrot.lane.b32.xlu0 %v505, 91
      %v511 = vpop.permute.xlu0 %510
      %vm512 = vcmask 744448
      %v513 = vsel %vm512, %v507, %v509
      %v514 = vsel %vm512, %v509, %v511
      %518 = vst [vmem:[#allocation3 + $0x48] sm:$0xf0] %v513
      %519 = vst [vmem:[#allocation3 + $0x50] sm:$0xf0] %v514
      %520 = vst.msk [vmem:[#allocation3 + $0x58] sm:$0xf0] %vm366, %v511
      %v521 = vld [vmem:[#allocation2] sm:$0xff]
      %v522 = vld [vmem:[#allocation2 + $0x8] sm:$0xf]
      %525 = vst [vmem:[#allocation1] ss:$2 sm:$0xff] %v521
      %s526 = scalar_lea.vmem [#allocation1], 16
      %527 = vst [vmem:[%s526] ss:$2 sm:$0xff] %v522
      %v528 = vld.sshfl [vmem:[#allocation1] sm:$0xff pattern:$0x75316420]
      %v529 = vld.sshfl [vmem:[#allocation1 + $0x8] sm:$0xff pattern:$0x75316420]
      %v530 = vld.sshfl [vmem:[#allocation1 + $0x10] sm:$0xff pattern:$0x75316420]
      %531 = vrot.lane.b32.xlu0 %v528, 90
      %v532 = vpop.permute.xlu0 %531
      %533 = vrot.lane.b32.xlu0 %v529, 90
      %v534 = vpop.permute.xlu0 %533
      %535 = vrot.lane.b32.xlu0 %v530, 90
      %v536 = vpop.permute.xlu0 %535
      %vm537 = vcmask 736256
      %v538 = vsel %vm537, %v532, %v534
      %v539 = vsel %vm537, %v534, %v536
      %543 = vst [vmem:[#allocation3 + $0x60] sm:$0xf] %v538
      %544 = vst [vmem:[#allocation3 + $0x68] sm:$0xf] %v539
      %545 = vst.msk [vmem:[#allocation3 + $0x70] sm:$0xf] %vm339, %v536
      %v546 = vld [vmem:[%s1] sm:$0xf]
      %v547 = vld [vmem:[#allocation3] sm:$0xff]
      %v548 = vld [vmem:[#allocation3 + $0x8] sm:$0xff]
      %v549 = vld [vmem:[#allocation3 + $0x10] sm:$0xff]
      %v550 = vld [vmem:[#allocation3 + $0x18] sm:$0xff]
      %v551 = vld [vmem:[#allocation3 + $0x20] sm:$0xff]
      %v552 = vld [vmem:[#allocation3 + $0x28] sm:$0xff]
      %v553 = vld [vmem:[#allocation3 + $0x30] sm:$0xff]
      %v554 = vld [vmem:[#allocation3 + $0x38] sm:$0xff]
      %v555 = vld [vmem:[#allocation3 + $0x40] sm:$0xff]
      %v556 = vld [vmem:[#allocation3 + $0x48] sm:$0xff]
      %v557 = vld [vmem:[#allocation3 + $0x50] sm:$0xff]
      %v558 = vld [vmem:[#allocation3 + $0x58] sm:$0xff]
      %v559 = vld [vmem:[#allocation3 + $0x60] sm:$0xf]
      %v560 = vld [vmem:[#allocation3 + $0x68] sm:$0xf]
      %v561 = vld [vmem:[#allocation3 + $0x70] sm:$0xf]
      %v562 = vpack.c.bf16 %v550, %v547
      %v563 = vpack.c.bf16 %v551, %v548
      %v564 = vpack.c.bf16 %v552, %v549
      %v565 = vpack.c.bf16 %v556, %v553
      %v566 = vpack.c.bf16 %v557, %v554
      %v567 = vpack.c.bf16 %v558, %v555
      %v568 = vpack.c.bf16 %v559, %v559
      %v569 = vpack.c.bf16 %v560, %v560
      %v570 = vpack.c.bf16 %v561, %v561
      %vm571 = vcmask 293888
      %v573 = vsel %vm571, %v546, 0
      %vm575 = vcmask 1041408
      %v577 = vsel %vm575, %v568, 0
      %v580 = vsel %vm575, %v569, 0
      %v583 = vsel %vm575, %v570, 0
      %585 = vmatpush.bf16.msra.mxu0 0
      %586 = vmatpush.bf16.msra.mxu0 0
      %587 = vmatpush.bf16.msra.mxu0 0
      %588 = vmatpush.bf16.msra.mxu0 0
      %589 = vmatpush.bf16.msra.mxu0 0
      %590 = vmatpush.bf16.msra.mxu0 %v577
      %591 = vmatpush.bf16.msra.mxu0 %v565
      %592 = vmatpush.bf16.msra.mxu0 %v562
      %593 = vmatmul.bf16.gmra.mxu0 %v573
      %v594 = vpop.f32.mrf.mxu0
      %v595 = vadd.f32 0.0, %v594
      %v596 = vpop.f32.mrf.mxu0
      %597 = vdwg.mxu0
      %598 = vmatpush.bf16.msra.mxu0 0
      %599 = vmatpush.bf16.msra.mxu0 0
      %600 = vmatpush.bf16.msra.mxu0 0
      %601 = vmatpush.bf16.msra.mxu0 0
      %602 = vmatpush.bf16.msra.mxu0 0
      %603 = vmatpush.bf16.msra.mxu0 %v580
      %604 = vmatpush.bf16.msra.mxu0 %v566
      %605 = vmatpush.bf16.msra.mxu0 %v563
      %606 = vmatmul.bf16.gmra.mxu0 %v573
      %v607 = vpop.f32.mrf.mxu0
      %v608 = vadd.f32 0.0, %v607
      %v609 = vpop.f32.mrf.mxu0
      %610 = vdwg.mxu0
      %611 = vmatpush.bf16.msra.mxu0 0
      %612 = vmatpush.bf16.msra.mxu0 0
      %613 = vmatpush.bf16.msra.mxu0 0
      %614 = vmatpush.bf16.msra.mxu0 0
      %615 = vmatpush.bf16.msra.mxu0 0
      %616 = vmatpush.bf16.msra.mxu0 %v583
      %617 = vmatpush.bf16.msra.mxu0 %v567
      %618 = vmatpush.bf16.msra.mxu0 %v564
      %619 = vmatmul.bf16.gmra.mxu0 %v573
      %v620 = vpop.f32.mrf.mxu0
      %v621 = vadd.f32 0.0, %v620
      %v622 = vpop.f32.mrf.mxu0
      %623 = vdwg.mxu0
      %v624 = vld [vmem:[%s2] sm:$0xff]
      %v625 = vld [vmem:[%s3] sm:$0xff]
      %v626 = vmul.f32 %v595, %v624
      %v627 = vadd.f32 %v626, %v625
      %vm628 = vcmask 130048
      %629 = vst.msk [vmem:[%s197] sm:$0xff] %vm628, %v627
      %631 = vrot.lane.b32.xlu0 %v624, 18
      %v632 = vpop.permute.xlu0 %631
      %v634 = vmul.f32 %v595, %v632
      %636 = vrot.lane.b32.xlu0 %v625, 18
      %v637 = vpop.permute.xlu0 %636
      %v639 = vadd.f32 %v634, %v637
      %641 = vrot.lane.b32.xlu0 %v639, 126
      %v642 = vpop.permute.xlu0 %641
      %vm644 = vcmask 261248
      %645 = vst.msk [vmem:[%s197] sm:$0xff] %vm644, %v642
      %646 = vrot.lane.b32.xlu0 %v624, 36
      %v647 = vpop.permute.xlu0 %646
      %v649 = vmul.f32 %v595, %v647
      %650 = vrot.lane.b32.xlu0 %v625, 36
      %v651 = vpop.permute.xlu0 %650
      %v653 = vadd.f32 %v649, %v651
      %655 = vrot.lane.b32.xlu0 %v653, 124
      %v656 = vpop.permute.xlu0 %655
      %vm658 = vcmask 392448
      %659 = vst.msk [vmem:[%s197] sm:$0xff] %vm658, %v656
      %660 = vrot.lane.b32.xlu0 %v624, 54
      %v661 = vpop.permute.xlu0 %660
      %v663 = vmul.f32 %v595, %v661
      %664 = vrot.lane.b32.xlu0 %v625, 54
      %v665 = vpop.permute.xlu0 %664
      %v667 = vadd.f32 %v663, %v665
      %669 = vrot.lane.b32.xlu0 %v667, 122
      %v670 = vpop.permute.xlu0 %669
      %vm672 = vcmask 523648
      %673 = vst.msk [vmem:[%s197] sm:$0xff] %vm672, %v670
      %674 = vrot.lane.b32.xlu0 %v624, 72
      %v675 = vpop.permute.xlu0 %674
      %v677 = vmul.f32 %v595, %v675
      %678 = vrot.lane.b32.xlu0 %v625, 72
      %v679 = vpop.permute.xlu0 %678
      %v681 = vadd.f32 %v677, %v679
      %683 = vrot.lane.b32.xlu0 %v681, 120
      %v684 = vpop.permute.xlu0 %683
      %vm686 = vcmask 654848
      %687 = vst.msk [vmem:[%s197] sm:$0xff] %vm686, %v684
      %688 = vrot.lane.b32.xlu0 %v624, 90
      %v689 = vpop.permute.xlu0 %688
      %v691 = vmul.f32 %v595, %v689
      %692 = vrot.lane.b32.xlu0 %v625, 90
      %v693 = vpop.permute.xlu0 %692
      %v695 = vadd.f32 %v691, %v693
      %697 = vrot.lane.b32.xlu0 %v695, 118
      %v698 = vpop.permute.xlu0 %697
      %vm700 = vcmask 786048
      %701 = vst.msk [vmem:[%s197] sm:$0xff] %vm700, %v698
      %702 = vrot.lane.b32.xlu0 %v624, 108
      %v703 = vpop.permute.xlu0 %702
      %v705 = vmul.f32 %v595, %v703
      %706 = vrot.lane.b32.xlu0 %v625, 108
      %v707 = vpop.permute.xlu0 %706
      %v709 = vadd.f32 %v705, %v707
      %711 = vrot.lane.b32.xlu0 %v709, 116
      %v712 = vpop.permute.xlu0 %711
      %vm714 = vcmask 917248
      %715 = vst.msk [vmem:[%s197] sm:$0xff] %vm714, %v712
      %716 = vrot.lane.b32.xlu0 %v624, 126
      %v717 = vpop.permute.xlu0 %716
      %v719 = vmul.f32 %v595, %v717
      %v720 = vmul.f32 %v608, %v717
      %721 = vrot.lane.b32.xlu0 %v625, 126
      %v722 = vpop.permute.xlu0 %721
      %v724 = vadd.f32 %v719, %v722
      %v725 = vadd.f32 %v720, %v722
      %728 = vrot.lane.b32.xlu0 %v724, 114
      %v729 = vpop.permute.xlu0 %728
      %730 = vrot.lane.b32.xlu0 %v725, 114
      %v731 = vpop.permute.xlu0 %730
      %vm732 = vcmask 932864
      %v733 = vsel %vm732, %v729, %v731
      %vm735 = vcmask 1048448
      %736 = vst.msk [vmem:[%s197] sm:$0xff] %vm735, %v733
      %737 = vrot.lane.b32.xlu0 %v624, 16
      %v738 = vpop.permute.xlu0 %737
      %v740 = vmul.f32 %v608, %v738
      %741 = vrot.lane.b32.xlu0 %v625, 16
      %v742 = vpop.permute.xlu0 %741
      %v744 = vadd.f32 %v740, %v742
      %746 = vrot.lane.b32.xlu0 %v744, 112
      %v747 = vpop.permute.xlu0 %746
      %749 = vst.msk [vmem:[%s197 + $0x8] sm:$0xff] %vm628, %v747
      %750 = vrot.lane.b32.xlu0 %v624, 34
      %v751 = vpop.permute.xlu0 %750
      %v753 = vmul.f32 %v608, %v751
      %754 = vrot.lane.b32.xlu0 %v625, 34
      %v755 = vpop.permute.xlu0 %754
      %v757 = vadd.f32 %v753, %v755
      %759 = vrot.lane.b32.xlu0 %v757, 110
      %v760 = vpop.permute.xlu0 %759
      %762 = vst.msk [vmem:[%s197 + $0x8] sm:$0xff] %vm644, %v760
      %763 = vrot.lane.b32.xlu0 %v624, 52
      %v764 = vpop.permute.xlu0 %763
      %v766 = vmul.f32 %v608, %v764
      %767 = vrot.lane.b32.xlu0 %v625, 52
      %v768 = vpop.permute.xlu0 %767
      %v770 = vadd.f32 %v766, %v768
      %772 = vrot.lane.b32.xlu0 %v770, 108
      %v773 = vpop.permute.xlu0 %772
      %775 = vst.msk [vmem:[%s197 + $0x8] sm:$0xff] %vm658, %v773
      %776 = vrot.lane.b32.xlu0 %v624, 70
      %v777 = vpop.permute.xlu0 %776
      %v779 = vmul.f32 %v608, %v777
      %780 = vrot.lane.b32.xlu0 %v625, 70
      %v781 = vpop.permute.xlu0 %780
      %v783 = vadd.f32 %v779, %v781
      %785 = vrot.lane.b32.xlu0 %v783, 106
      %v786 = vpop.permute.xlu0 %785
      %788 = vst.msk [vmem:[%s197 + $0x8] sm:$0xff] %vm672, %v786
      %789 = vrot.lane.b32.xlu0 %v624, 88
      %v790 = vpop.permute.xlu0 %789
      %v792 = vmul.f32 %v608, %v790
      %793 = vrot.lane.b32.xlu0 %v625, 88
      %v794 = vpop.permute.xlu0 %793
      %v796 = vadd.f32 %v792, %v794
      %798 = vrot.lane.b32.xlu0 %v796, 104
      %v799 = vpop.permute.xlu0 %798
      %801 = vst.msk [vmem:[%s197 + $0x8] sm:$0xff] %vm686, %v799
      %802 = vrot.lane.b32.xlu0 %v624, 106
      %v803 = vpop.permute.xlu0 %802
      %v805 = vmul.f32 %v608, %v803
      %806 = vrot.lane.b32.xlu0 %v625, 106
      %v807 = vpop.permute.xlu0 %806
      %v809 = vadd.f32 %v805, %v807
      %811 = vrot.lane.b32.xlu0 %v809, 102
      %v812 = vpop.permute.xlu0 %811
      %814 = vst.msk [vmem:[%s197 + $0x8] sm:$0xff] %vm700, %v812
      %815 = vrot.lane.b32.xlu0 %v624, 124
      %v816 = vpop.permute.xlu0 %815
      %v818 = vmul.f32 %v608, %v816
      %v819 = vmul.f32 %v621, %v816
      %820 = vrot.lane.b32.xlu0 %v625, 124
      %v821 = vpop.permute.xlu0 %820
      %v823 = vadd.f32 %v818, %v821
      %v824 = vadd.f32 %v819, %v821
      %827 = vrot.lane.b32.xlu0 %v823, 100
      %v828 = vpop.permute.xlu0 %827
      %829 = vrot.lane.b32.xlu0 %v824, 100
      %v830 = vpop.permute.xlu0 %829
      %vm831 = vcmask 818176
      %v832 = vsel %vm831, %v828, %v830
      %834 = vst.msk [vmem:[%s197 + $0x8] sm:$0xff] %vm714, %v832
      %835 = vrot.lane.b32.xlu0 %v624, 14
      %v836 = vpop.permute.xlu0 %835
      %v838 = vmul.f32 %v621, %v836
      %839 = vrot.lane.b32.xlu0 %v625, 14
      %v840 = vpop.permute.xlu0 %839
      %v842 = vadd.f32 %v838, %v840
      %844 = vrot.lane.b32.xlu0 %v842, 98
      %v845 = vpop.permute.xlu0 %844
      %847 = vst.msk [vmem:[%s197 + $0x8] sm:$0xff] %vm735, %v845
      %p848 = scmp.lt.s32.totalorder %s15, 1
      %s849 = scalar_select %p848, %s15, 1
      %s850 = smul.addr %s849, 2
      %s851 = smul.addr %s850, 8
      %s852 = scalar_lea.vmem %s4, %s851
      // Predicated region
      $region37: #{voice_conv2d.1} parent=35 // pred_check
        %p853 = pneg %p122
      $region38: #{voice_conv2d.1} parent=35 // pred_check_branch
        %855 = sbr.rel (%p853) target = $region40
      $region39: #{voice_conv2d.1} parent=35 // pred_region
        _
      $region40: #{voice_conv2d.1} parent=35 // pred_fallthru
        _
    $region36: #{voice_conv2d.1} parent=5 // pred_fallthru
      _
    %p856 = scmp.le.s32.totalorder 2, %s10
    // Predicated region
    $region41: #{voice_conv2d.1} parent=5 // pred_check
      %p857 = pneg %p856
    $region42: #{voice_conv2d.1} parent=5 // pred_check_branch
      %859 = sbr.rel (%p857) target = $region44
    $region43: #{voice_conv2d.1} parent=5 // pred_region
      %s860 = ssub.s32 %s10, 2
      // Predicated region
      $region45: #{voice_conv2d.1} parent=43 // pred_check
        %p861 = pneg %p128
      $region46: #{voice_conv2d.1} parent=43 // pred_check_branch
        %863 = sbr.rel (%p861) target = $region48
      $region47: #{voice_conv2d.1} parent=43 // pred_region
        %p864 = scmp.lt.s32.totalorder %s16, 1
        %s865 = scalar_select %p864, %s16, 1
        %s866 = smul.addr %s865, 2
        %s867 = smul.addr %s866, 8
        %s868 = scalar_lea.vmem %s4, %s867
      $region48: #{voice_conv2d.1} parent=43 // pred_fallthru
        _
    $region44: #{voice_conv2d.1} parent=5 // pred_fallthru
      _
  $region6: #{voice_conv2d.1} parent=0 // loop_footer
    %s14 = sadd.s32 1, %s10
  $region7: #{voice_conv2d.1} parent=0 // loop_footer_branch
    %9 = sbr.rel target = $region3
  $region8: #{voice_conv2d.1} parent=0 // loop_exit
    _

</llo_original>
